<compile_context>
chip_gen: v6e
topology: v6e:2x2x1
jax: 0.10.0
libtpu: 0.0.40
codegen_flags: <defaults>
</compile_context>

<pallas_src>
import functools

import jax
import jax.numpy as jnp
import numpy as np
from jax import lax
from jax.experimental import pallas as pl
from jax.experimental.pallas import tpu as pltpu

BN_EPS = 1e-5
_LANE = 128
_SUBLANE = 8


# ------------------------------- small helpers -------------------------------
def _round_up(x, m):
    return (x + m - 1) // m * m


def _pick_tile(n, candidates):
    for c in candidates:
        if n % c == 0:
            return c
    raise ValueError(f"no tile in {candidates} divides {n}")


def _spatial_tile(h, wv, target=512):
    """Largest multiple of Wv (itself a multiple of 8) that divides H*Wv and
    is <= target; guarantees aligned, divisor-exact spatial tiles."""
    g = 1
    for cand in range(1, h + 1):
        if h % cand == 0 and wv * cand <= target:
            g = cand
    return wv * g


def _cparams(semantics, vmem_bytes_est):
    limit = int(min(max(int(vmem_bytes_est * 1.5), 32 * 1024 * 1024),
                    96 * 1024 * 1024))
    return pltpu.CompilerParams(dimension_semantics=semantics,
                                vmem_limit_bytes=limit)


# ----------------------------- Pallas kernels -------------------------------
def _matmul_bias_relu6_kernel(a_ref, w_ref, b_ref, o_ref, acc_ref):
    """out = relu6(A @ W + b), K-tiled accumulation in a f32 VMEM scratch."""
    k = pl.program_id(1)

    @pl.when(k == 0)
    def _():
        acc_ref[...] = jnp.zeros_like(acc_ref)

    acc_ref[...] += jnp.dot(a_ref[...], w_ref[...],
                            preferred_element_type=jnp.float32)

    @pl.when(k == pl.num_programs(1) - 1)
    def _():
        y = acc_ref[...] + b_ref[...]
        o_ref[...] = jnp.clip(y, 0.0, 6.0).astype(o_ref.dtype)


def matmul_bias_relu6(a, w, bias, *, tm, out_dtype=jnp.bfloat16):
    """a: (M, K) bf16, w: (K, Cout) bf16 (BN scale folded), bias: (Cout,) f32."""
    M, K = a.shape
    Kw, Cout = w.shape
    assert K == Kw
    m_pad = _round_up(M, tm)
    if m_pad != M:                       # only the tiny pooled path hits this
        a = jnp.pad(a, ((0, m_pad - M), (0, 0)))
    tk = _pick_tile(K, (512, 256, 128))
    b2 = bias.reshape(1, Cout).astype(jnp.float32)
    obytes = jnp.dtype(out_dtype).itemsize
    vmem_est = (2 * tm * tk * 2 + 2 * tk * Cout * 2 +
                2 * tm * Cout * obytes + tm * Cout * 4 + Cout * 4)

    out = pl.pallas_call(
        _matmul_bias_relu6_kernel,
        out_shape=jax.ShapeDtypeStruct((m_pad, Cout), out_dtype),
        grid_spec=pltpu.PrefetchScalarGridSpec(
            num_scalar_prefetch=0,
            grid=(m_pad // tm, K // tk),
            in_specs=[
                pl.BlockSpec((tm, tk), lambda i, k: (i, k)),
                pl.BlockSpec((tk, Cout), lambda i, k: (k, 0)),
                pl.BlockSpec((1, Cout), lambda i, k: (0, 0)),
            ],
            out_specs=pl.BlockSpec((tm, Cout), lambda i, k: (i, 0)),
            scratch_shapes=[pltpu.VMEM((tm, Cout), jnp.float32)],
        ),
        compiler_params=_cparams(("parallel", "arbitrary"), vmem_est),
    )(a, w, b2)
    return out[:M] if m_pad != M else out


def _dilated3x3_kernel(x_ref, w_ref, b_ref, o_ref, acc_ref, *, H, Wv, d, off):
    """Fused dilated 3x3 conv + BN + ReLU6 for one image / one channel chunk.

    The 9 taps are unrolled as static windowed loads of the d_max-padded input
    block already resident in VMEM (no im2col in HBM, no full-block copy)."""
    c = pl.program_id(1)

    @pl.when(c == 0)
    def _():
        acc_ref[...] = jnp.zeros_like(acc_ref)

    tc = w_ref.shape[1]
    acc = acc_ref[...]
    for ky in range(3):
        r0 = off + d * ky
        for kx in range(3):
            s = off + d * kx
            win = x_ref[0, pl.ds(r0, H), pl.ds(s, Wv), :]      # (H, Wv, tc)
            acc = acc + jnp.dot(win.reshape(H * Wv, tc), w_ref[ky * 3 + kx],
                                preferred_element_type=jnp.float32)
    acc_ref[...] = acc

    @pl.when(c == pl.num_programs(1) - 1)
    def _():
        y = jnp.clip(acc_ref[...] + b_ref[...], 0.0, 6.0)
        o_ref[...] = y.reshape(o_ref.shape).astype(o_ref.dtype)


def dilated_conv3x3_bn_relu6(x_sp, w9, bias, *, H, Wv, d, off,
                             out_dtype=jnp.bfloat16):
    """x_sp: (N, H+2*dmax, Wp, Cin_p) bf16 shared d_max-padded image,
    w9: (9, Cin_p, Cout_p) bf16, bias: (Cout_p,) f32."""
    N, Hp, Wp, Cin_p = x_sp.shape
    Cout_p = w9.shape[-1]
    HWv = H * Wv
    # channel chunk: keep the padded input block <= ~8 MiB (v7x / default-limit
    # headroom), prefer 256 when it fits.
    tc = 128
    if Cin_p % 256 == 0 and Hp * Wp * 256 * 2 <= 8 * 1024 * 1024:
        tc = 256
    b2 = bias.reshape(1, Cout_p).astype(jnp.float32)
    kern = functools.partial(_dilated3x3_kernel, H=H, Wv=Wv, d=d, off=off)
    vmem_est = (2 * Hp * Wp * tc * 2 + 2 * 9 * tc * Cout_p * 2 +
                2 * HWv * Cout_p * 2 + HWv * Cout_p * 4 +
                2 * H * Wv * tc * 2)
    # TODO(synk): tile H in strips with a 2*d halo (manual DMA) so OS=8 feature
    # maps pipeline with more headroom on v7x's 64 MiB VMEM and expose a second
    # parallel grid axis for its 2 TensorCores; also consider applying all
    # three dilation weight sets to the same resident chunk in one kernel.
    return pl.pallas_call(
        kern,
        out_shape=jax.ShapeDtypeStruct((N, HWv, Cout_p), out_dtype),
        grid_spec=pltpu.PrefetchScalarGridSpec(
            num_scalar_prefetch=0,
            grid=(N, Cin_p // tc),
            in_specs=[
                pl.BlockSpec((1, Hp, Wp, tc), lambda n, c: (n, 0, 0, c)),
                pl.BlockSpec((9, tc, Cout_p), lambda n, c: (0, c, 0)),
                pl.BlockSpec((1, Cout_p), lambda n, c: (0, 0)),
            ],
            out_specs=pl.BlockSpec((1, HWv, Cout_p), lambda n, c: (n, 0, 0)),
            scratch_shapes=[pltpu.VMEM((HWv, Cout_p), jnp.float32)],
        ),
        compiler_params=_cparams(("parallel", "arbitrary"), vmem_est),
    )(x_sp, w9, b2)


def _gap_kernel(x_ref, o_ref, acc_ref, *, inv_hw):
    j = pl.program_id(1)

    @pl.when(j == 0)
    def _():
        acc_ref[...] = jnp.zeros_like(acc_ref)

    acc_ref[...] += jnp.sum(x_ref[...].astype(jnp.float32), axis=1)

    @pl.when(j == pl.num_programs(1) - 1)
    def _():
        o_ref[...] = acc_ref[...] * inv_hw


def global_avg_pool(x_flat, *, hw_true, tsp):
    """x_flat: (N, HWv, C) bf16 (zero-padded cols/rows) -> (N, C) f32 mean.
    Tiled over (N parallel, spatial arbitrary); zero padding contributes 0."""
    N, HWv, C = x_flat.shape
    kern = functools.partial(_gap_kernel, inv_hw=1.0 / hw_true)
    vmem_est = 2 * tsp * C * 2 + 2 * C * 4 + C * 4
    return pl.pallas_call(
        kern,
        out_shape=jax.ShapeDtypeStruct((N, C), jnp.float32),
        grid_spec=pltpu.PrefetchScalarGridSpec(
            num_scalar_prefetch=0,
            grid=(N, HWv // tsp),
            in_specs=[pl.BlockSpec((1, tsp, C), lambda n, j: (n, j, 0))],
            out_specs=pl.BlockSpec((1, C), lambda n, j: (n, 0)),
            scratch_shapes=[pltpu.VMEM((1, C), jnp.float32)],
        ),
        compiler_params=_cparams(("parallel", "arbitrary"), vmem_est),
    )(x_flat)


def _final_proj_kernel(b1_ref, b2_ref, b3_ref, b4_ref,
                       w1_ref, w2_ref, w3_ref, w4_ref,
                       pb_ref, bias_ref, o_ref):
    """Fused concat + 1x1 projection + BN + ReLU6.  The pooled branch enters
    as a per-image bias, so neither the (M, 5*Cout) concat nor the (M, Cout)
    broadcast is ever materialized in HBM."""
    y = jnp.dot(b1_ref[0], w1_ref[...], preferred_element_type=jnp.float32)
    y = y + jnp.dot(b2_ref[0], w2_ref[...], preferred_element_type=jnp.float32)
    y = y + jnp.dot(b3_ref[0], w3_ref[...], preferred_element_type=jnp.float32)
    y = y + jnp.dot(b4_ref[0], w4_ref[...], preferred_element_type=jnp.float32)
    y = y + pb_ref[0] + bias_ref[...]
    o_ref[...] = jnp.clip(y, 0.0, 6.0).reshape(o_ref.shape).astype(o_ref.dtype)


def final_projection(branches, w_slices, pool_bias, bias, *, tsp):
    b1, b2, b3, b4 = branches                       # each (N, HWv, Cout_p) bf16
    N, HWv, Cout_p = b1.shape
    pb = pool_bias.reshape(N, 1, Cout_p).astype(jnp.float32)
    bias2 = bias.reshape(1, Cout_p).astype(jnp.float32)
    branch_spec = pl.BlockSpec((1, tsp, Cout_p), lambda n, j: (n, j, 0))
    weight_spec = pl.BlockSpec((Cout_p, Cout_p), lambda n, j: (0, 0))
    vmem_est = (4 * 2 * tsp * Cout_p * 2 + 4 * 2 * Cout_p * Cout_p * 2 +
                2 * tsp * Cout_p * 4 + 4 * Cout_p * 4)
    return pl.pallas_call(
        _final_proj_kernel,
        out_shape=jax.ShapeDtypeStruct((N, HWv, Cout_p), jnp.float32),
        grid_spec=pltpu.PrefetchScalarGridSpec(
            num_scalar_prefetch=0,
            grid=(N, HWv // tsp),
            in_specs=[branch_spec] * 4 + [weight_spec] * 4 + [
                pl.BlockSpec((1, 1, Cout_p), lambda n, j: (n, 0, 0)),
                pl.BlockSpec((1, Cout_p), lambda n, j: (0, 0)),
            ],
            out_specs=pl.BlockSpec((1, tsp, Cout_p), lambda n, j: (n, j, 0)),
        ),
        compiler_params=_cparams(("parallel", "parallel"), vmem_est),
    )(b1, b2, b3, b4, *w_slices, pb, bias2)


# ------------------------------- glue / setup -------------------------------
def fuse_bn(conv_bias, bn):
    """Fold conv bias + inference-mode BatchNorm into (scale, bias)."""
    gamma, beta, mean, var = bn
    s = gamma / jnp.sqrt(var + BN_EPS)
    b = beta + (conv_bias - mean) * s
    return s, b


def init_params(key, cin, cout, output_stride=16):
    if output_stride == 16:
        dilations = (6, 12, 18)
    elif output_stride == 8:
        dilations = (12, 24, 36)
    else:
        raise ValueError("Output stride must be 8 or 16")
    ks = jax.random.split(key, 64)   # plenty of keys (36 are consumed)
    kit = iter(ks)

    def conv_w(shape, scale=0.1):
        return scale * jax.random.normal(next(kit), shape, dtype=jnp.float32)

    def bn_params():
        gamma = 0.5 + jax.random.uniform(next(kit), (cout,), dtype=jnp.float32)
        beta = 0.1 * jax.random.normal(next(kit), (cout,), dtype=jnp.float32)
        mean = 0.1 * jax.random.normal(next(kit), (cout,), dtype=jnp.float32)
        var = 0.5 + jax.random.uniform(next(kit), (cout,), dtype=jnp.float32)
        return (gamma, beta, mean, var)

    p = {"dilations": dilations}
    p["w1"] = conv_w((cin, cout))
    p["b1"] = conv_w((cout,))
    p["bn1"] = bn_params()
    for i in range(2, 5):
        p[f"w{i}"] = conv_w((3, 3, cin, cout))     # HWIO
        p[f"b{i}"] = conv_w((cout,))
        p[f"bn{i}"] = bn_params()
    p["w_pool"] = conv_w((cin, cout))
    p["b_pool"] = conv_w((cout,))
    p["bn5"] = bn_params()
    p["w_final"] = conv_w((5 * cout, cout))
    p["b_final"] = conv_w((cout,))
    p["bn6"] = bn_params()
    return p


def aspp_forward(x_nchw, params):
    N, Cin, H, W = x_nchw.shape
    Cout = params["w1"].shape[-1]
    dilations = params["dilations"]
    dmax = max(dilations)

    Cin_p = _round_up(Cin, _LANE)
    Cout_p = _round_up(Cout, _LANE)
    Wv = _round_up(W, _SUBLANE)          # sublane-aligned image rows
    HWv = H * Wv
    tsp = _spatial_tile(H, Wv)           # spatial tile (mult of 8, divides HWv)

    # NCHW -> NHWC straight to bf16 (no f32 NHWC intermediate); zero-pad W->Wv
    # and Cin->Cin_p once so every kernel block is lane/sublane aligned.
    x_bf = jnp.transpose(x_nchw, (0, 2, 3, 1)).astype(jnp.bfloat16)
    x_bf = jnp.pad(x_bf, ((0, 0), (0, 0), (0, Wv - W), (0, Cin_p - Cin)))
    x_flat = x_bf.reshape(N, HWv, Cin_p)            # free reshape (no copy)

    def pad_w(w, s):                                 # fold BN scale + pad
        wp = (w * s[None, :]).astype(jnp.bfloat16)
        return jnp.pad(wp, ((0, Cin_p - Cin), (0, Cout_p - Cout)))

    def pad_b(b):
        return jnp.pad(b.astype(jnp.float32), (0, Cout_p - Cout))

    # branch 1: 1x1 conv + BN + ReLU6 over the flattened image
    s1, b1 = fuse_bn(params["b1"], params["bn1"])
    out1 = matmul_bias_relu6(x_flat.reshape(N * HWv, Cin_p),
                             pad_w(params["w1"], s1), pad_b(b1),
                             tm=tsp).reshape(N, HWv, Cout_p)
    branch_outs = [out1]

    # branches 2-4: dilated 3x3 conv + BN + ReLU6.  One d_max-padded copy of
    # the image is shared by all three branches (per-branch offset is static).
    Hp = H + 2 * dmax
    Wp = _round_up(Wv + 2 * dmax, _SUBLANE)
    x_sp = jnp.pad(x_bf, ((0, 0), (dmax, dmax), (dmax, Wp - Wv - dmax), (0, 0)))
    for i, d in enumerate(dilations, start=2):
        s, b = fuse_bn(params[f"b{i}"], params[f"bn{i}"])
        w9 = (params[f"w{i}"].reshape(9, Cin, Cout)
              * s[None, None, :]).astype(jnp.bfloat16)
        w9 = jnp.pad(w9, ((0, 0), (0, Cin_p - Cin), (0, Cout_p - Cout)))
        branch_outs.append(
            dilated_conv3x3_bn_relu6(x_sp, w9, pad_b(b),
                                     H=H, Wv=Wv, d=d, off=dmax - d))

    # pooling branch: GAP -> 1x1 conv -> BN -> ReLU6.  The 1x1 -> HxW bilinear
    # upsample (align_corners=True) is a constant broadcast, folded into the
    # final projection as a per-image bias.
    pooled = global_avg_pool(x_flat, hw_true=H * W, tsp=tsp)     # (N, Cin_p) f32
    s5, b5 = fuse_bn(params["b_pool"], params["bn5"])
    pool_out = matmul_bias_relu6(pooled.astype(jnp.bfloat16),
                                 pad_w(params["w_pool"], s5), pad_b(b5),
                                 tm=_round_up(N, _SUBLANE),
                                 out_dtype=jnp.float32)          # (N, Cout_p)

    # final projection: fused concat + 1x1 conv + BN + ReLU6
    s6, b6 = fuse_bn(params["b_final"], params["bn6"])
    wf = params["w_final"] * s6[None, :]                         # (5*Cout, Cout)

    def pad_wf(sl):
        return jnp.pad(sl.astype(jnp.bfloat16),
                       ((0, Cout_p - Cout), (0, Cout_p - Cout)))

    w_slices = [pad_wf(wf[i * Cout:(i + 1) * Cout]) for i in range(4)]
    pool_bias = jnp.dot(pool_out.astype(jnp.bfloat16), pad_wf(wf[4 * Cout:]),
                        preferred_element_type=jnp.float32)      # (N, Cout_p)
    out = final_projection(branch_outs, w_slices, pool_bias, pad_b(b6),
                           tsp=tsp)                              # (N, HWv, Cout_p)
    out = out.reshape(N, H, Wv, Cout_p)[:, :, :W, :Cout]
    return jnp.transpose(out, (0, 3, 1, 2))                      # NCHW


# ------------------------------ plain-JAX reference --------------------------
def aspp_reference(x_nchw, params):
    x = jnp.transpose(x_nchw, (0, 2, 3, 1)).astype(jnp.float32)
    N, H, W, Cin = x.shape
    Cout = params["w1"].shape[-1]

    def bn_relu6(y, bn):
        g, be, m, v = bn
        return jnp.clip((y - m) / jnp.sqrt(v + BN_EPS) * g + be, 0.0, 6.0)

    def conv(inp, w_hwio, b, d=1, pad=0):
        y = lax.conv_general_dilated(
            inp, w_hwio, (1, 1), [(pad, pad), (pad, pad)],
            rhs_dilation=(d, d),
            dimension_numbers=("NHWC", "HWIO", "NHWC"))
        return y + b

    o1 = bn_relu6(conv(x, params["w1"].reshape(1, 1, Cin, Cout), params["b1"]),
                  params["bn1"])
    outs = [o1]
    for i, d in enumerate(params["dilations"], start=2):
        outs.append(bn_relu6(
            conv(x, params[f"w{i}"], params[f"b{i}"], d=d, pad=d),
            params[f"bn{i}"]))
    pooled = jnp.mean(x, axis=(1, 2), keepdims=True)
    p = bn_relu6(conv(pooled, params["w_pool"].reshape(1, 1, Cin, Cout),
                      params["b_pool"]), params["bn5"])
    outs.append(jnp.broadcast_to(p, (N, H, W, Cout)))
    cat = jnp.concatenate(outs, axis=-1)
    out = bn_relu6(conv(cat, params["w_final"].reshape(1, 1, 5 * Cout, Cout),
                        params["b_final"]), params["bn6"])
    return jnp.transpose(out, (0, 3, 1, 2))


# ------------------------------------ main -----------------------------------
if __name__ == "__main__":
    key = jax.random.PRNGKey(0)
    kx, kp = jax.random.split(key)

    N, Cin, H, W = 2, 4, 16, 16
    Cout = 8
    x = jax.random.normal(kx, (N, Cin, H, W), dtype=jnp.float32)
    params = init_params(kp, Cin, Cout, output_stride=16)

    out = jax.block_until_ready(aspp_forward(x, params))
    assert out.shape == (N, Cout, H, W), out.shape

    ref = jax.block_until_ready(aspp_reference(x, params))
    # bf16 MXU inputs (f32 accumulation) -> bf16-level tolerances vs f32 ref.
    np.testing.assert_allclose(np.asarray(out), np.asarray(ref),
                               rtol=5e-2, atol=5e-2)

    print("KERNEL_OK")
</pallas_src>

<mosaic_0001>
module attributes {stable_mosaic.version = 11 : i64} {
  func.func @_matmul_bias_relu6_kernel(%arg0: i32, %arg1: i32, %arg2: memref<256x128xbf16, #tpu.memory_space<vmem>>, %arg3: memref<128x128xbf16, #tpu.memory_space<vmem>>, %arg4: memref<1x128xf32, #tpu.memory_space<vmem>>, %arg5: memref<256x128xbf16, #tpu.memory_space<vmem>>, %arg6: memref<256x128xf32, #tpu.memory_space<vmem>>) attributes {dimension_semantics = [#tpu.dimension_semantics<parallel>, #tpu.dimension_semantics<arbitrary>], iteration_bounds = array<i64: 2, 1>, scalar_prefetch = 0 : i64, scratch_operands = 1 : i64, tpu.core_type = #tpu.core_type<tc>, window_params = [{transform_indices = @transform_0, window_bounds = array<i64: 256, 128>}, {transform_indices = @transform_1, window_bounds = array<i64: 128, 128>}, {pipeline_mode = #tpu.pipeline_mode<synchronous>, transform_indices = @transform_2, window_bounds = array<i64: 1, 128>}, {transform_indices = @transform_3, window_bounds = array<i64: 256, 128>}]} {
    %c0_i32 = arith.constant 0 : i32
    %0 = arith.cmpi eq, %arg1, %c0_i32 : i32
    %1 = arith.extui %0 : i1 to i32
    %c0_i32_0 = arith.constant 0 : i32
    %2 = arith.cmpi ne, %1, %c0_i32_0 : i32
    scf.if %2 {
      %cst_10 = arith.constant 0.000000e+00 : f32
      %12 = vector.broadcast %cst_10 : f32 to vector<256x128xf32>
      %c0_11 = arith.constant 0 : index
      %c0_12 = arith.constant 0 : index
      %13 = vector.load %arg6[%c0_11, %c0_12] : memref<256x128xf32, #tpu.memory_space<vmem>>, vector<256x128xf32>
      tpu.vector_store %arg6[%c0_11, %c0_12], %12 {strides = array<i32>} : memref<256x128xf32, #tpu.memory_space<vmem>>, vector<256x128xf32>,
    } else {
    }
    %c0 = arith.constant 0 : index
    %c0_1 = arith.constant 0 : index
    %3 = vector.load %arg6[%c0, %c0_1] : memref<256x128xf32, #tpu.memory_space<vmem>>, vector<256x128xf32>
    %c0_2 = arith.constant 0 : index
    %c0_3 = arith.constant 0 : index
    %4 = vector.load %arg2[%c0_2, %c0_3] : memref<256x128xbf16, #tpu.memory_space<vmem>>, vector<256x128xbf16>
    %c0_4 = arith.constant 0 : index
    %c0_5 = arith.constant 0 : index
    %5 = vector.load %arg3[%c0_4, %c0_5] : memref<128x128xbf16, #tpu.memory_space<vmem>>, vector<128x128xbf16>
    %cst = arith.constant dense<0.000000e+00> : vector<256x128xf32>
    %6 = tpu.matmul %4, %5, %cst {dimension_numbers = #tpu.dot_dimension_numbers<[1], [0], [0], [1], [0, 0, 1, 1], [], []>} : vector<256x128xbf16>, vector<128x128xbf16>, vector<256x128xf32> -> vector<256x128xf32>
    %7 = arith.addf %3, %6 : vector<256x128xf32>
    %c0_6 = arith.constant 0 : index
    %c0_7 = arith.constant 0 : index
    %8 = vector.load %arg6[%c0_6, %c0_7] : memref<256x128xf32, #tpu.memory_space<vmem>>, vector<256x128xf32>
    tpu.vector_store %arg6[%c0_6, %c0_7], %7 {strides = array<i32>} : memref<256x128xf32, #tpu.memory_space<vmem>>, vector<256x128xf32>,
    %c0_i32_8 = arith.constant 0 : i32
    %9 = arith.cmpi eq, %arg1, %c0_i32_8 : i32
    %10 = arith.extui %9 : i1 to i32
    %c0_i32_9 = arith.constant 0 : i32
    %11 = arith.cmpi ne, %10, %c0_i32_9 : i32
    scf.if %11 {
      %c0_10 = arith.constant 0 : index
      %c0_11 = arith.constant 0 : index
      %12 = vector.load %arg6[%c0_10, %c0_11] : memref<256x128xf32, #tpu.memory_space<vmem>>, vector<256x128xf32>
      %c0_12 = arith.constant 0 : index
      %c0_13 = arith.constant 0 : index
      %13 = vector.load %arg4[%c0_12, %c0_13] : memref<1x128xf32, #tpu.memory_space<vmem>>, vector<1x128xf32>
      %14 = vector.broadcast %13 : vector<1x128xf32> to vector<256x128xf32>
      %15 = arith.addf %12, %14 : vector<256x128xf32>
      %cst_14 = arith.constant 0.000000e+00 : f32
      %cst_15 = arith.constant 6.000000e+00 : f32
      %16 = vector.broadcast %cst_14 : f32 to vector<256x128xf32>
      %17 = arith.maximumf %16, %15 : vector<256x128xf32>
      %18 = vector.broadcast %cst_15 : f32 to vector<256x128xf32>
      %19 = arith.minimumf %18, %17 : vector<256x128xf32>
      %20 = arith.truncf %19 : vector<256x128xf32> to vector<256x128xbf16>
      %c0_16 = arith.constant 0 : index
      %c0_17 = arith.constant 0 : index
      %21 = vector.load %arg5[%c0_16, %c0_17] : memref<256x128xbf16, #tpu.memory_space<vmem>>, vector<256x128xbf16>
      tpu.vector_store %arg5[%c0_16, %c0_17], %20 {strides = array<i32>} : memref<256x128xbf16, #tpu.memory_space<vmem>>, vector<256x128xbf16>,
    } else {
    }
    return
  }
  func.func @transform_0(%arg0: i32, %arg1: i32) -> (i32, i32) {
    %c0_i32 = arith.constant 0 : i32
    return %arg0, %arg1 : i32, i32
  }
  func.func @transform_1(%arg0: i32, %arg1: i32) -> (i32, i32) {
    %c0_i32 = arith.constant 0 : i32
    %c0_i32_0 = arith.constant 0 : i32
    return %arg1, %c0_i32 : i32, i32
  }
  func.func @transform_2(%arg0: i32, %arg1: i32) -> (i32, i32) {
    %c0_i32 = arith.constant 0 : i32
    %c0_i32_0 = arith.constant 0 : i32
    %c0_i32_1 = arith.constant 0 : i32
    return %c0_i32, %c0_i32_0 : i32, i32
  }
  func.func @transform_3(%arg0: i32, %arg1: i32) -> (i32, i32) {
    %c0_i32 = arith.constant 0 : i32
    %c0_i32_0 = arith.constant 0 : i32
    return %arg0, %c0_i32 : i32, i32
  }
}

</mosaic_0001>

<llo_original>
// kernel: tpu_custom_call.1
$region0: #{tpu_custom_call.1}
  #allocation0 [shape = 'u32[]', space=smem, size = 0x4, offset = 0x4, fixed_abs, tag = 'smem constant byte address 0x4 - core index']
  #allocation1 [shape = 'u32[144,128]{1,0:T(1,128)}', space=vmem, size = 0x12000, scoped, tag = 'internal scratch']
  #allocation2 [shape = 'f32[256,128]{1,0:T(8,128)}', space=vmem, size = 0x20000, scoped, tag = 'scratch operand']
  %s0 = inlined_call_operand.hbm [shape: bf16[512,128], index: 0, kind: input, shape index: {}]
  %s1 = inlined_call_operand.hbm [shape: bf16[128,128], index: 1, kind: input, shape index: {}]
  %s2 = inlined_call_operand.vmem [shape: f32[1,128], index: 2, kind: input, shape index: {}]
  %s3 = inlined_call_operand.hbm [shape: bf16[512,128], index: 3, kind: output, shape index: {}]
  %s4 = sld [smem:[#allocation0]]
  $region61: #{tpu_custom_call.1} parent=0
    _
  %s6 = ssub.s32 1, %s4
  %s7 = scalar_select 0, %s6, %s4
  $region1: #{tpu_custom_call.1} parent=0
    #allocation3 [shape = 'u8[131072]{0}', space=vmem, size = 0x20000, scoped, tag = 'input window, operand 0']
    #allocation4 [shape = 's32[2]{0}', space=sflag, size = 0x8, scoped, tag = 'scoped memory for tpu_custom_call.1']
    #allocation5 [shape = 's32[2]{0}', space=sflag, size = 0x8, scoped, tag = 'scoped memory for tpu_custom_call.1']
    #allocation6 [shape = 'u8[32768]{0}', space=vmem, size = 0x8000, scoped, tag = 'input window, operand 1, single buffered']
    #allocation7 [shape = 's32[1]{0}', space=sflag, size = 0x4, scoped, tag = 'scoped memory for tpu_custom_call.1']
    #allocation8 [shape = 'u8[131072]{0}', space=vmem, size = 0x20000, scoped, tag = 'output window, operand 0']
    %8 = vsyncpa [#allocation4], 0
    %s9 = scalar_lea.sflag [#allocation4], 1
    %10 = vsyncpa %s9, 0
    %11 = vsyncpa [#allocation7], 0
    %12 = vsyncpa [#allocation5], 0
    %s13 = scalar_lea.sflag [#allocation5], 1
    %14 = vsyncpa %s13, 0
    loop: start=0, step=1, limit=4
    $region2: #{tpu_custom_call.1} parent=1 // loop_pre_header
      _
    $region3: #{tpu_custom_call.1} parent=1 // loop_header
      %s16 = sphi 0, %s20
      %p17 = scmp.ge.s32.totalorder %s16, 4
      %s23 = sphi 0, %s35
      %s24 = sphi 0, %s31
      %s25 = sphi 0, %s23
      %s26 = sphi 0, %s24
      %s27 = sphi 0, %s25
      %s28 = sphi 0, %s26
      %s40 = sphi 0, %s42
      %s43 = sphi 0, %s40
      %s44 = sphi 0, %s43
      %s60 = sphi 0, %s44
      %s66 = sphi 0, %s68
      %s69 = sphi 0, %s66
      %s70 = sphi 0, %s69
      %s86 = sphi 0, %s70
      %s90 = sphi 0, %s90
      %s92 = sphi 0, %s90
      %s93 = sphi 0, %s92
      %s107 = sphi 0, %s93
      %s113 = sphi 0, %s115
      %s116 = sphi 0, %s113
      %s117 = sphi 0, %s116
      %s133 = sphi 0, %s117
    $region4: #{tpu_custom_call.1} parent=1 // loop_header_branch
      %19 = sbr.rel (%p17) target = $region8
    $region5: #{tpu_custom_call.1} parent=1 // loop_body
      %s21 = ssub.s32 %s16, 1
      %s22 = ssub.s32 %s16, 2
      %s29 = sadd.s32 1, %s24
      %p30 = scmp.ge.s32.totalorder %s29, 1
      %s31 = scalar_select %p30, 0, %s29
      %s32 = sadd.s32 1, %s23
      %s33 = scalar_select %p30, %s32, %s23
      %p34 = scmp.ge.s32.totalorder %s33, 2
      %s35 = scalar_select %p34, 0, %s33
      %s36 = ssub.s32 %s23, %s35
      %s37 = ssub.s32 %s24, %s31
      %s38 = sor.u32 %s36, %s37
      %p39 = scmp.eq.s32.totalorder %s38, 0
      %s41 = sadd.s32 %s40, 1
      %s42 = scalar_select %p39, %s40, %s41
      %p45 = pneg %p39
      %p46 = scmp.eq.s32.totalorder %s16, 1
      %p47 = por %p45, %p46
      %p48 = scmp.ne.s32.totalorder %s40, %s43
      %p49 = scmp.eq.s32.totalorder %s16, 0
      %p50 = por %p48, %p49
      %p51 = scmp.ne.s32.totalorder %s40, %s43
      %p52 = scmp.eq.s32.totalorder %s21, 1
      %p53 = por %p51, %p52
      %p54 = scmp.ne.s32.totalorder %s43, %s44
      %p55 = scmp.eq.s32.totalorder %s21, 0
      %p56 = por %p54, %p55
      %p57 = scmp.ne.s32.totalorder %s43, %s44
      %p58 = scmp.eq.s32.totalorder %s22, 1
      %p59 = por %p57, %p58
      %p61 = scmp.ne.s32.totalorder %s44, %s60
      %p62 = scmp.eq.s32.totalorder %s22, 0
      %p63 = por %p61, %p62
      %s64 = ssub.s32 %s24, %s31
      %p65 = scmp.eq.s32.totalorder %s64, 0
      %s67 = sadd.s32 %s66, 1
      %s68 = scalar_select %p65, %s66, %s67
      %p71 = pneg %p65
      %p72 = scmp.eq.s32.totalorder %s16, 1
      %p73 = por %p71, %p72
      %p74 = scmp.ne.s32.totalorder %s66, %s69
      %p75 = scmp.eq.s32.totalorder %s16, 0
      %p76 = por %p74, %p75
      %p77 = scmp.ne.s32.totalorder %s66, %s69
      %p78 = scmp.eq.s32.totalorder %s21, 1
      %p79 = por %p77, %p78
      %p80 = scmp.ne.s32.totalorder %s69, %s70
      %p81 = scmp.eq.s32.totalorder %s21, 0
      %p82 = por %p80, %p81
      %p83 = scmp.ne.s32.totalorder %s69, %s70
      %p84 = scmp.eq.s32.totalorder %s22, 1
      %p85 = por %p83, %p84
      %p87 = scmp.ne.s32.totalorder %s70, %s86
      %p88 = scmp.eq.s32.totalorder %s22, 0
      %p89 = por %p87, %p88
      %s91 = sadd.s32 %s90, 1
      %p94 = scmp.eq.s32.totalorder %s16, 1
      %p95 = scmp.ne.s32.totalorder %s90, %s92
      %p96 = scmp.eq.s32.totalorder %s16, 0
      %p97 = por %p95, %p96
      %p98 = scmp.ne.s32.totalorder %s90, %s92
      %p99 = scmp.eq.s32.totalorder %s21, 1
      %p100 = por %p98, %p99
      %p101 = scmp.ne.s32.totalorder %s92, %s93
      %p102 = scmp.eq.s32.totalorder %s21, 0
      %p103 = por %p101, %p102
      %p104 = scmp.ne.s32.totalorder %s92, %s93
      %p105 = scmp.eq.s32.totalorder %s22, 1
      %p106 = por %p104, %p105
      %p108 = scmp.ne.s32.totalorder %s93, %s107
      %p109 = scmp.eq.s32.totalorder %s22, 0
      %p110 = por %p108, %p109
      %s111 = ssub.s32 %s23, %s35
      %p112 = scmp.eq.s32.totalorder %s111, 0
      %s114 = sadd.s32 %s113, 1
      %s115 = scalar_select %p112, %s113, %s114
      %p118 = pneg %p112
      %p119 = scmp.eq.s32.totalorder %s16, 1
      %p120 = por %p118, %p119
      %p121 = scmp.ne.s32.totalorder %s113, %s116
      %p122 = scmp.eq.s32.totalorder %s16, 0
      %p123 = por %p121, %p122
      %p124 = scmp.ne.s32.totalorder %s113, %s116
      %p125 = scmp.eq.s32.totalorder %s21, 1
      %p126 = por %p124, %p125
      %p127 = scmp.ne.s32.totalorder %s116, %s117
      %p128 = scmp.eq.s32.totalorder %s21, 0
      %p129 = por %p127, %p128
      %p130 = scmp.ne.s32.totalorder %s116, %s117
      %p131 = scmp.eq.s32.totalorder %s22, 1
      %p132 = por %p130, %p131
      %p134 = scmp.ne.s32.totalorder %s117, %s133
      %p135 = scmp.eq.s32.totalorder %s22, 0
      %p136 = por %p134, %p135
      %p137 = scmp.le.s32.totalorder 1, %s16
      %p138 = scmp.lt.s32.totalorder %s16, 3
      %p139 = pnand %p137, %p138
      %p140 = pneg %p139
      // Predicated region
      $region9: #{tpu_custom_call.1} parent=5 // pred_check
        _
      $region10: #{tpu_custom_call.1} parent=5 // pred_check_branch
        %142 = sbr.rel (%p139) target = $region12
      $region11: #{tpu_custom_call.1} parent=5 // pred_region
        %s143 = ssub.s32 %s16, 1
        // Predicated region
        $region13: #{tpu_custom_call.1} parent=11 // pred_check
          %p144 = pneg %p82
        $region14: #{tpu_custom_call.1} parent=11 // pred_check_branch
          %146 = sbr.rel (%p144) target = $region16
        $region15: #{tpu_custom_call.1} parent=11 // pred_region
          %s147 = smul.u32 16, %s26
          %s149 = ssub.s32 1024, 1024
          %150 = vsyncadd [#allocation7], %s149
          %s151 = smul.addr %s147, 64
          %s152 = scalar_lea.hbm %s1, %s151
          %s153 = sshll.u32 [#allocation6], 4
          %s154 = int_to_ptr.vmem [resolvable:$true] %s153
          %159 = dma.hbm_to_vmem [thread:$0]  %s152, 1024, %s154, [#allocation7], 64, 64, 4
        $region16: #{tpu_custom_call.1} parent=11 // pred_fallthru
          _
        // Predicated region
        $region17: #{tpu_custom_call.1} parent=11 // pred_check
          %p160 = pneg %p103
        $region18: #{tpu_custom_call.1} parent=11 // pred_check_branch
          %162 = sbr.rel (%p160) target = $region20
        $region19: #{tpu_custom_call.1} parent=11 // pred_region
          _
        $region20: #{tpu_custom_call.1} parent=11 // pred_fallthru
          _
      $region12: #{tpu_custom_call.1} parent=5 // pred_fallthru
        _
      %p163 = scmp.lt.s32.totalorder %s16, 2
      // Predicated region
      $region21: #{tpu_custom_call.1} parent=5 // pred_check
        %p164 = pneg %p163
      $region22: #{tpu_custom_call.1} parent=5 // pred_check_branch
        %166 = sbr.rel (%p164) target = $region24
      $region23: #{tpu_custom_call.1} parent=5 // pred_region
        // Predicated region
        $region25: #{tpu_custom_call.1} parent=23 // pred_check
          %p167 = pneg %p50
        $region26: #{tpu_custom_call.1} parent=23 // pred_check_branch
          %169 = sbr.rel (%p167) target = $region28
        $region27: #{tpu_custom_call.1} parent=23 // pred_region
          %s170 = sand.u32 %s40, 1
          %s171 = scalar_lea.sflag [#allocation4], %s170
          %s172 = sand.u32 %s40, 1
          %s173 = smul.addr %s172, 128
          %s174 = scalar_lea.vmem [#allocation3], %s173
          %s175 = smul.u32 32, %s23
          %s177 = ssub.s32 2048, 2048
          %178 = vsyncadd %s171, %s177
          %s179 = sadd.s32 %s24, %s175
          %s180 = smul.addr %s179, 64
          %s181 = scalar_lea.hbm %s0, %s180
          %s182 = sshll.u32 %s174, 4
          %s183 = int_to_ptr.vmem [resolvable:$true] %s182
          %188 = dma.hbm_to_vmem [thread:$0]  %s181, 2048, %s183, %s171, 64, 64, 4
        $region28: #{tpu_custom_call.1} parent=23 // pred_fallthru
          _
      $region24: #{tpu_custom_call.1} parent=5 // pred_fallthru
        _
      %p189 = scmp.le.s32.totalorder 1, %s16
      %p190 = scmp.lt.s32.totalorder %s16, 3
      %p191 = pnand %p189, %p190
      %p192 = pneg %p191
      // Predicated region
      $region29: #{tpu_custom_call.1} parent=5 // pred_check
        _
      $region30: #{tpu_custom_call.1} parent=5 // pred_check_branch
        %194 = sbr.rel (%p191) target = $region32
      $region31: #{tpu_custom_call.1} parent=5 // pred_region
        %s195 = ssub.s32 %s16, 1
        %s196 = sand.u32 %s43, 1
        %s197 = scalar_lea.sflag [#allocation4], %s196
        %s198 = sand.u32 %s43, 1
        %s199 = smul.addr %s198, 128
        %s200 = scalar_lea.vmem [#allocation3], %s199
        // Predicated region
        $region33: #{tpu_custom_call.1} parent=31 // pred_check
          %p201 = pneg %p56
        $region34: #{tpu_custom_call.1} parent=31 // pred_check_branch
          %203 = sbr.rel (%p201) target = $region36
        $region35: #{tpu_custom_call.1} parent=31 // pred_region
          %204 = dma.done %s197, 2048
        $region36: #{tpu_custom_call.1} parent=31 // pred_fallthru
          _
        // Predicated region
        $region37: #{tpu_custom_call.1} parent=31 // pred_check
          %p205 = pneg %p82
        $region38: #{tpu_custom_call.1} parent=31 // pred_check_branch
          %207 = sbr.rel (%p205) target = $region40
        $region39: #{tpu_custom_call.1} parent=31 // pred_region
          %208 = dma.done [#allocation7], 1024
        $region40: #{tpu_custom_call.1} parent=31 // pred_fallthru
          _
        %s209 = sand.u32 %s43, 1
        %s210 = scalar_lea.sflag [#allocation4], %s209
        %s211 = sand.u32 %s43, 1
        %s212 = smul.addr %s211, 128
        %s213 = scalar_lea.vmem [#allocation3], %s212
        %p214 = pneg %p56
        %p215 = pneg %p53
        %p216 = pneg %p82
        %p217 = pneg %p79
        %p218 = pneg %p103
        %p219 = pneg %p100
        %p220 = pneg %p129
        %p221 = pneg %p126
        %s222 = sand.u32 %s116, 1
        %s223 = scalar_lea.sflag [#allocation5], %s222
        %s224 = sand.u32 %s116, 1
        %s225 = smul.addr %s224, 128
        %s226 = scalar_lea.vmem [#allocation8], %s225
        %s227 = smul.u32 32, %s25
        %s228 = smul.u32 16, %s26
        %s229 = smul.u32 32, %s25
        %p231 = scmp.eq.s32.totalorder %s26, 0
        // Predicated region
        $region41: #{tpu_custom_call.1} parent=31 // pred_check
          %p232 = pneg %p231
        $region42: #{tpu_custom_call.1} parent=31 // pred_check_branch
          %234 = sbr.rel (%p232) target = $region44
        $region43: #{tpu_custom_call.1} parent=31 // pred_region
          %235 = vst [vmem:[#allocation2] sm:$0xff] 0.0
          %236 = vst [vmem:[#allocation2 + $0x8] sm:$0xff] 0.0
          %237 = vst [vmem:[#allocation2 + $0x10] sm:$0xff] 0.0
          %238 = vst [vmem:[#allocation2 + $0x18] sm:$0xff] 0.0
          %239 = vst [vmem:[#allocation2 + $0x20] sm:$0xff] 0.0
          %240 = vst [vmem:[#allocation2 + $0x28] sm:$0xff] 0.0
          %241 = vst [vmem:[#allocation2 + $0x30] sm:$0xff] 0.0
          %242 = vst [vmem:[#allocation2 + $0x38] sm:$0xff] 0.0
          %243 = vst [vmem:[#allocation2 + $0x40] sm:$0xff] 0.0
          %244 = vst [vmem:[#allocation2 + $0x48] sm:$0xff] 0.0
          %245 = vst [vmem:[#allocation2 + $0x50] sm:$0xff] 0.0
          %246 = vst [vmem:[#allocation2 + $0x58] sm:$0xff] 0.0
          %247 = vst [vmem:[#allocation2 + $0x60] sm:$0xff] 0.0
          %248 = vst [vmem:[#allocation2 + $0x68] sm:$0xff] 0.0
          %249 = vst [vmem:[#allocation2 + $0x70] sm:$0xff] 0.0
          %250 = vst [vmem:[#allocation2 + $0x78] sm:$0xff] 0.0
          %251 = vst [vmem:[#allocation2 + $0x80] sm:$0xff] 0.0
          %252 = vst [vmem:[#allocation2 + $0x88] sm:$0xff] 0.0
          %253 = vst [vmem:[#allocation2 + $0x90] sm:$0xff] 0.0
          %254 = vst [vmem:[#allocation2 + $0x98] sm:$0xff] 0.0
          %255 = vst [vmem:[#allocation2 + $0xa0] sm:$0xff] 0.0
          %256 = vst [vmem:[#allocation2 + $0xa8] sm:$0xff] 0.0
          %257 = vst [vmem:[#allocation2 + $0xb0] sm:$0xff] 0.0
          %258 = vst [vmem:[#allocation2 + $0xb8] sm:$0xff] 0.0
          %259 = vst [vmem:[#allocation2 + $0xc0] sm:$0xff] 0.0
          %260 = vst [vmem:[#allocation2 + $0xc8] sm:$0xff] 0.0
          %261 = vst [vmem:[#allocation2 + $0xd0] sm:$0xff] 0.0
          %262 = vst [vmem:[#allocation2 + $0xd8] sm:$0xff] 0.0
          %263 = vst [vmem:[#allocation2 + $0xe0] sm:$0xff] 0.0
          %264 = vst [vmem:[#allocation2 + $0xe8] sm:$0xff] 0.0
          %265 = vst [vmem:[#allocation2 + $0xf0] sm:$0xff] 0.0
          %266 = vst [vmem:[#allocation2 + $0xf8] sm:$0xff] 0.0
        $region44: #{tpu_custom_call.1} parent=31 // pred_fallthru
          _
        %v267 = vld [vmem:[#allocation2] sm:$0xff]
        %v268 = vld [vmem:[#allocation2 + $0x8] sm:$0xff]
        %v269 = vld [vmem:[#allocation2 + $0x10] sm:$0xff]
        %v270 = vld [vmem:[#allocation2 + $0x18] sm:$0xff]
        %v271 = vld [vmem:[#allocation2 + $0x20] sm:$0xff]
        %v272 = vld [vmem:[#allocation2 + $0x28] sm:$0xff]
        %v273 = vld [vmem:[#allocation2 + $0x30] sm:$0xff]
        %v274 = vld [vmem:[#allocation2 + $0x38] sm:$0xff]
        %v275 = vld [vmem:[#allocation2 + $0x40] sm:$0xff]
        %v276 = vld [vmem:[#allocation2 + $0x48] sm:$0xff]
        %v277 = vld [vmem:[#allocation2 + $0x50] sm:$0xff]
        %v278 = vld [vmem:[#allocation2 + $0x58] sm:$0xff]
        %v279 = vld [vmem:[#allocation2 + $0x60] sm:$0xff]
        %v280 = vld [vmem:[#allocation2 + $0x68] sm:$0xff]
        %v281 = vld [vmem:[#allocation2 + $0x70] sm:$0xff]
        %v282 = vld [vmem:[#allocation2 + $0x78] sm:$0xff]
        %v283 = vld [vmem:[#allocation2 + $0x80] sm:$0xff]
        %v284 = vld [vmem:[#allocation2 + $0x88] sm:$0xff]
        %v285 = vld [vmem:[#allocation2 + $0x90] sm:$0xff]
        %v286 = vld [vmem:[#allocation2 + $0x98] sm:$0xff]
        %v287 = vld [vmem:[#allocation2 + $0xa0] sm:$0xff]
        %v288 = vld [vmem:[#allocation2 + $0xa8] sm:$0xff]
        %v289 = vld [vmem:[#allocation2 + $0xb0] sm:$0xff]
        %v290 = vld [vmem:[#allocation2 + $0xb8] sm:$0xff]
        %v291 = vld [vmem:[#allocation2 + $0xc0] sm:$0xff]
        %v292 = vld [vmem:[#allocation2 + $0xc8] sm:$0xff]
        %v293 = vld [vmem:[#allocation2 + $0xd0] sm:$0xff]
        %v294 = vld [vmem:[#allocation2 + $0xd8] sm:$0xff]
        %v295 = vld [vmem:[#allocation2 + $0xe0] sm:$0xff]
        %v296 = vld [vmem:[#allocation2 + $0xe8] sm:$0xff]
        %v297 = vld [vmem:[#allocation2 + $0xf0] sm:$0xff]
        %v298 = vld [vmem:[#allocation2 + $0xf8] sm:$0xff]
        %v299 = vld [vmem:[%s200] sm:$0xf]
        %v300 = vld [vmem:[%s200 + $0x4] sm:$0xf]
        %v301 = vld [vmem:[%s200 + $0x8] sm:$0xf]
        %v302 = vld [vmem:[%s200 + $0xc] sm:$0xf]
        %v303 = vld [vmem:[%s200 + $0x10] sm:$0xf]
        %v304 = vld [vmem:[%s200 + $0x14] sm:$0xf]
        %v305 = vld [vmem:[%s200 + $0x18] sm:$0xf]
        %v306 = vld [vmem:[%s200 + $0x1c] sm:$0xf]
        %v307 = vld [vmem:[%s200 + $0x20] sm:$0xf]
        %v308 = vld [vmem:[%s200 + $0x24] sm:$0xf]
        %v309 = vld [vmem:[%s200 + $0x28] sm:$0xf]
        %v310 = vld [vmem:[%s200 + $0x2c] sm:$0xf]
        %v311 = vld [vmem:[%s200 + $0x30] sm:$0xf]
        %v312 = vld [vmem:[%s200 + $0x34] sm:$0xf]
        %v313 = vld [vmem:[%s200 + $0x38] sm:$0xf]
        %v314 = vld [vmem:[%s200 + $0x3c] sm:$0xf]
        %v315 = vld [vmem:[%s200 + $0x40] sm:$0xf]
        %v316 = vld [vmem:[%s200 + $0x44] sm:$0xf]
        %v317 = vld [vmem:[%s200 + $0x48] sm:$0xf]
        %v318 = vld [vmem:[%s200 + $0x4c] sm:$0xf]
        %v319 = vld [vmem:[%s200 + $0x50] sm:$0xf]
        %v320 = vld [vmem:[%s200 + $0x54] sm:$0xf]
        %v321 = vld [vmem:[%s200 + $0x58] sm:$0xf]
        %v322 = vld [vmem:[%s200 + $0x5c] sm:$0xf]
        %v323 = vld [vmem:[%s200 + $0x60] sm:$0xf]
        %v324 = vld [vmem:[%s200 + $0x64] sm:$0xf]
        %v325 = vld [vmem:[%s200 + $0x68] sm:$0xf]
        %v326 = vld [vmem:[%s200 + $0x6c] sm:$0xf]
        %v327 = vld [vmem:[%s200 + $0x70] sm:$0xf]
        %v328 = vld [vmem:[%s200 + $0x74] sm:$0xf]
        %v329 = vld [vmem:[%s200 + $0x78] sm:$0xf]
        %v330 = vld [vmem:[%s200 + $0x7c] sm:$0xf]
        %v331 = vld [vmem:[#allocation6] sm:$0xf]
        %v332 = vld [vmem:[#allocation6 + $0x4] sm:$0xf]
        %v333 = vld [vmem:[#allocation6 + $0x8] sm:$0xf]
        %v334 = vld [vmem:[#allocation6 + $0xc] sm:$0xf]
        %v335 = vld [vmem:[#allocation6 + $0x10] sm:$0xf]
        %v336 = vld [vmem:[#allocation6 + $0x14] sm:$0xf]
        %v337 = vld [vmem:[#allocation6 + $0x18] sm:$0xf]
        %v338 = vld [vmem:[#allocation6 + $0x1c] sm:$0xf]
        %v339 = vld [vmem:[#allocation6 + $0x20] sm:$0xf]
        %v340 = vld [vmem:[#allocation6 + $0x24] sm:$0xf]
        %v341 = vld [vmem:[#allocation6 + $0x28] sm:$0xf]
        %v342 = vld [vmem:[#allocation6 + $0x2c] sm:$0xf]
        %v343 = vld [vmem:[#allocation6 + $0x30] sm:$0xf]
        %v344 = vld [vmem:[#allocation6 + $0x34] sm:$0xf]
        %v345 = vld [vmem:[#allocation6 + $0x38] sm:$0xf]
        %v346 = vld [vmem:[#allocation6 + $0x3c] sm:$0xf]
        %v379 = vunpack.c.l.b16 %v299
        %v380 = vunpack.c.l.b16 %v300
        %v381 = vunpack.c.l.b16 %v301
        %v382 = vunpack.c.l.b16 %v302
        %v383 = vunpack.c.l.b16 %v303
        %v384 = vunpack.c.l.b16 %v304
        %v385 = vunpack.c.l.b16 %v305
        %v386 = vunpack.c.l.b16 %v306
        %v387 = vunpack.c.l.b16 %v307
        %v388 = vunpack.c.l.b16 %v308
        %v389 = vunpack.c.l.b16 %v309
        %v390 = vunpack.c.l.b16 %v310
        %v391 = vunpack.c.l.b16 %v311
        %v392 = vunpack.c.l.b16 %v312
        %v393 = vunpack.c.l.b16 %v313
        %v394 = vunpack.c.l.b16 %v314
        %v395 = vunpack.c.l.b16 %v315
        %v396 = vunpack.c.l.b16 %v316
        %v397 = vunpack.c.l.b16 %v317
        %v398 = vunpack.c.l.b16 %v318
        %v399 = vunpack.c.l.b16 %v319
        %v400 = vunpack.c.l.b16 %v320
        %v401 = vunpack.c.l.b16 %v321
        %v402 = vunpack.c.l.b16 %v322
        %v403 = vunpack.c.l.b16 %v323
        %v404 = vunpack.c.l.b16 %v324
        %v405 = vunpack.c.l.b16 %v325
        %v406 = vunpack.c.l.b16 %v326
        %v407 = vunpack.c.l.b16 %v327
        %v408 = vunpack.c.l.b16 %v328
        %v409 = vunpack.c.l.b16 %v329
        %v410 = vunpack.c.l.b16 %v330
        %v411 = vpack.c.b16 %v380, %v379
        %v412 = vpack.c.b16 %v382, %v381
        %v413 = vpack.c.b16 %v384, %v383
        %v414 = vpack.c.b16 %v386, %v385
        %v415 = vpack.c.b16 %v388, %v387
        %v416 = vpack.c.b16 %v390, %v389
        %v417 = vpack.c.b16 %v392, %v391
        %v418 = vpack.c.b16 %v394, %v393
        %v419 = vpack.c.b16 %v396, %v395
        %v420 = vpack.c.b16 %v398, %v397
        %v421 = vpack.c.b16 %v400, %v399
        %v422 = vpack.c.b16 %v402, %v401
        %v423 = vpack.c.b16 %v404, %v403
        %v424 = vpack.c.b16 %v406, %v405
        %v425 = vpack.c.b16 %v408, %v407
        %v426 = vpack.c.b16 %v410, %v409
        %v459 = vunpack.c.l.b16 %v331
        %v460 = vunpack.c.l.b16 %v332
        %v461 = vunpack.c.l.b16 %v333
        %v462 = vunpack.c.l.b16 %v334
        %v463 = vunpack.c.l.b16 %v335
        %v464 = vunpack.c.l.b16 %v336
        %v465 = vunpack.c.l.b16 %v337
        %v466 = vunpack.c.l.b16 %v338
        %v467 = vunpack.c.l.b16 %v339
        %v468 = vunpack.c.l.b16 %v340
        %v469 = vunpack.c.l.b16 %v341
        %v470 = vunpack.c.l.b16 %v342
        %v471 = vunpack.c.l.b16 %v343
        %v472 = vunpack.c.l.b16 %v344
        %v473 = vunpack.c.l.b16 %v345
        %v474 = vunpack.c.l.b16 %v346
        %v475 = vpack.c.b16 %v460, %v459
        %v476 = vpack.c.b16 %v462, %v461
        %v477 = vpack.c.b16 %v464, %v463
        %v478 = vpack.c.b16 %v466, %v465
        %v479 = vpack.c.b16 %v468, %v467
        %v480 = vpack.c.b16 %v470, %v469
        %v481 = vpack.c.b16 %v472, %v471
        %v482 = vpack.c.b16 %v474, %v473
        %491 = vmatprep.subr.bf16.mxu0 0
        %492 = vmatpush1.bf16.msra.mxu0 %v482
        %493 = vmatprep.subr.bf16.mxu0 0
        %494 = vmatpush1.bf16.msra.mxu0 %v481
        %495 = vmatprep.subr.bf16.mxu0 0
        %496 = vmatpush1.bf16.msra.mxu0 %v480
        %497 = vmatprep.subr.bf16.mxu0 0
        %498 = vmatpush1.bf16.msra.mxu0 %v479
        %499 = vmatprep.subr.bf16.mxu0 0
        %500 = vmatpush1.bf16.msra.mxu0 %v478
        %501 = vmatprep.subr.bf16.mxu0 0
        %502 = vmatpush1.bf16.msra.mxu0 %v477
        %503 = vmatprep.subr.bf16.mxu0 0
        %504 = vmatpush1.bf16.msra.mxu0 %v476
        %505 = vmatprep.subr.bf16.mxu0 0
        %506 = vmatpush1.bf16.msra.mxu0 %v475
        %507 = vmatprep.subr.bf16.mxu0 0
        %508 = vmatpush2.bf16.msra.mxu0 0
        %509 = vmatprep.subr.bf16.mxu0 0
        %510 = vmatpush2.bf16.msra.mxu0 0
        %511 = vmatprep.subr.bf16.mxu0 0
        %512 = vmatpush2.bf16.msra.mxu0 0
        %513 = vmatprep.subr.bf16.mxu0 0
        %514 = vmatpush2.bf16.msra.mxu0 0
        %515 = vmatprep.subr.bf16.mxu0 0
        %516 = vmatpush2.bf16.msra.mxu0 0
        %517 = vmatprep.subr.bf16.mxu0 0
        %518 = vmatpush2.bf16.msra.mxu0 0
        %519 = vmatprep.subr.bf16.mxu0 0
        %520 = vmatpush2.bf16.msra.mxu0 0
        %521 = vmatprep.subr.bf16.mxu0 0
        %522 = vmatpush2.bf16.msra.mxu0 0
        %523 = vmatprep.mubr.bf16.mxu0 0
        %524 = vmatmul.mubr.bf16.gmra.mxu0 %v411
        %v525 = vpop.f32.mrf.mxu0
        %v526 = vadd.f32 0.0, %v525
        %v527 = vpop.f32.mrf.mxu0
        %v528 = vpop.f32.mrf.mxu0
        %v529 = vadd.f32 0.0, %v528
        %v530 = vpop.f32.mrf.mxu0
        %531 = vmatprep.mubr.bf16.mxu0 0
        %532 = vmatmul.mubr.bf16.gmra.mxu0 %v412
        %v533 = vpop.f32.mrf.mxu0
        %v534 = vadd.f32 0.0, %v533
        %v535 = vpop.f32.mrf.mxu0
        %v536 = vpop.f32.mrf.mxu0
        %v537 = vadd.f32 0.0, %v536
        %v538 = vpop.f32.mrf.mxu0
        %539 = vmatprep.mubr.bf16.mxu0 0
        %540 = vmatmul.mubr.bf16.gmra.mxu0 %v413
        %v541 = vpop.f32.mrf.mxu0
        %v542 = vadd.f32 0.0, %v541
        %v543 = vpop.f32.mrf.mxu0
        %v544 = vpop.f32.mrf.mxu0
        %v545 = vadd.f32 0.0, %v544
        %v546 = vpop.f32.mrf.mxu0
        %547 = vmatprep.mubr.bf16.mxu0 0
        %548 = vmatmul.mubr.bf16.gmra.mxu0 %v414
        %v549 = vpop.f32.mrf.mxu0
        %v550 = vadd.f32 0.0, %v549
        %v551 = vpop.f32.mrf.mxu0
        %v552 = vpop.f32.mrf.mxu0
        %v553 = vadd.f32 0.0, %v552
        %v554 = vpop.f32.mrf.mxu0
        %555 = vmatprep.mubr.bf16.mxu0 0
        %556 = vmatmul.mubr.bf16.gmra.mxu0 %v415
        %v557 = vpop.f32.mrf.mxu0
        %v558 = vadd.f32 0.0, %v557
        %v559 = vpop.f32.mrf.mxu0
        %v560 = vpop.f32.mrf.mxu0
        %v561 = vadd.f32 0.0, %v560
        %v562 = vpop.f32.mrf.mxu0
        %563 = vmatprep.mubr.bf16.mxu0 0
        %564 = vmatmul.mubr.bf16.gmra.mxu0 %v416
        %v565 = vpop.f32.mrf.mxu0
        %v566 = vadd.f32 0.0, %v565
        %v567 = vpop.f32.mrf.mxu0
        %v568 = vpop.f32.mrf.mxu0
        %v569 = vadd.f32 0.0, %v568
        %v570 = vpop.f32.mrf.mxu0
        %571 = vmatprep.mubr.bf16.mxu0 0
        %572 = vmatmul.mubr.bf16.gmra.mxu0 %v417
        %v573 = vpop.f32.mrf.mxu0
        %v574 = vadd.f32 0.0, %v573
        %v575 = vpop.f32.mrf.mxu0
        %v576 = vpop.f32.mrf.mxu0
        %v577 = vadd.f32 0.0, %v576
        %v578 = vpop.f32.mrf.mxu0
        %579 = vmatprep.mubr.bf16.mxu0 0
        %580 = vmatmul.mubr.bf16.gmra.mxu0 %v418
        %v581 = vpop.f32.mrf.mxu0
        %v582 = vadd.f32 0.0, %v581
        %v583 = vpop.f32.mrf.mxu0
        %v584 = vpop.f32.mrf.mxu0
        %v585 = vadd.f32 0.0, %v584
        %v586 = vpop.f32.mrf.mxu0
        %587 = vmatprep.mubr.bf16.mxu0 0
        %588 = vmatmul.mubr.bf16.gmra.mxu0 %v419
        %v589 = vpop.f32.mrf.mxu0
        %v590 = vadd.f32 0.0, %v589
        %v591 = vpop.f32.mrf.mxu0
        %v592 = vpop.f32.mrf.mxu0
        %v593 = vadd.f32 0.0, %v592
        %v594 = vpop.f32.mrf.mxu0
        %595 = vmatprep.mubr.bf16.mxu0 0
        %596 = vmatmul.mubr.bf16.gmra.mxu0 %v420
        %v597 = vpop.f32.mrf.mxu0
        %v598 = vadd.f32 0.0, %v597
        %v599 = vpop.f32.mrf.mxu0
        %v600 = vpop.f32.mrf.mxu0
        %v601 = vadd.f32 0.0, %v600
        %v602 = vpop.f32.mrf.mxu0
        %603 = vmatprep.mubr.bf16.mxu0 0
        %604 = vmatmul.mubr.bf16.gmra.mxu0 %v421
        %v605 = vpop.f32.mrf.mxu0
        %v606 = vadd.f32 0.0, %v605
        %v607 = vpop.f32.mrf.mxu0
        %v608 = vpop.f32.mrf.mxu0
        %v609 = vadd.f32 0.0, %v608
        %v610 = vpop.f32.mrf.mxu0
        %611 = vmatprep.mubr.bf16.mxu0 0
        %612 = vmatmul.mubr.bf16.gmra.mxu0 %v422
        %v613 = vpop.f32.mrf.mxu0
        %v614 = vadd.f32 0.0, %v613
        %v615 = vpop.f32.mrf.mxu0
        %v616 = vpop.f32.mrf.mxu0
        %v617 = vadd.f32 0.0, %v616
        %v618 = vpop.f32.mrf.mxu0
        %619 = vmatprep.mubr.bf16.mxu0 0
        %620 = vmatmul.mubr.bf16.gmra.mxu0 %v423
        %v621 = vpop.f32.mrf.mxu0
        %v622 = vadd.f32 0.0, %v621
        %v623 = vpop.f32.mrf.mxu0
        %v624 = vpop.f32.mrf.mxu0
        %v625 = vadd.f32 0.0, %v624
        %v626 = vpop.f32.mrf.mxu0
        %627 = vmatprep.mubr.bf16.mxu0 0
        %628 = vmatmul.mubr.bf16.gmra.mxu0 %v424
        %v629 = vpop.f32.mrf.mxu0
        %v630 = vadd.f32 0.0, %v629
        %v631 = vpop.f32.mrf.mxu0
        %v632 = vpop.f32.mrf.mxu0
        %v633 = vadd.f32 0.0, %v632
        %v634 = vpop.f32.mrf.mxu0
        %635 = vmatprep.mubr.bf16.mxu0 0
        %636 = vmatmul.mubr.bf16.gmra.mxu0 %v425
        %v637 = vpop.f32.mrf.mxu0
        %v638 = vadd.f32 0.0, %v637
        %v639 = vpop.f32.mrf.mxu0
        %v640 = vpop.f32.mrf.mxu0
        %v641 = vadd.f32 0.0, %v640
        %v642 = vpop.f32.mrf.mxu0
        %643 = vmatprep.mubr.bf16.mxu0 0
        %644 = vmatmul.mubr.bf16.gmra.mxu0 %v426
        %v645 = vpop.f32.mrf.mxu0
        %v646 = vadd.f32 0.0, %v645
        %v647 = vpop.f32.mrf.mxu0
        %v648 = vpop.f32.mrf.mxu0
        %v649 = vadd.f32 0.0, %v648
        %v650 = vpop.f32.mrf.mxu0
        %651 = vdwg.mxu0
        %v652 = vadd.f32 %v267, %v526
        %v653 = vadd.f32 %v268, %v529
        %v654 = vadd.f32 %v269, %v534
        %v655 = vadd.f32 %v270, %v537
        %v656 = vadd.f32 %v271, %v542
        %v657 = vadd.f32 %v272, %v545
        %v658 = vadd.f32 %v273, %v550
        %v659 = vadd.f32 %v274, %v553
        %v660 = vadd.f32 %v275, %v558
        %v661 = vadd.f32 %v276, %v561
        %v662 = vadd.f32 %v277, %v566
        %v663 = vadd.f32 %v278, %v569
        %v664 = vadd.f32 %v279, %v574
        %v665 = vadd.f32 %v280, %v577
        %v666 = vadd.f32 %v281, %v582
        %v667 = vadd.f32 %v282, %v585
        %v668 = vadd.f32 %v283, %v590
        %v669 = vadd.f32 %v284, %v593
        %v670 = vadd.f32 %v285, %v598
        %v671 = vadd.f32 %v286, %v601
        %v672 = vadd.f32 %v287, %v606
        %v673 = vadd.f32 %v288, %v609
        %v674 = vadd.f32 %v289, %v614
        %v675 = vadd.f32 %v290, %v617
        %v676 = vadd.f32 %v291, %v622
        %v677 = vadd.f32 %v292, %v625
        %v678 = vadd.f32 %v293, %v630
        %v679 = vadd.f32 %v294, %v633
        %v680 = vadd.f32 %v295, %v638
        %v681 = vadd.f32 %v296, %v641
        %v682 = vadd.f32 %v297, %v646
        %v683 = vadd.f32 %v298, %v649
        %684 = vst [vmem:[#allocation2] sm:$0xff] %v652
        %685 = vst [vmem:[#allocation2 + $0x8] sm:$0xff] %v653
        %686 = vst [vmem:[#allocation2 + $0x10] sm:$0xff] %v654
        %687 = vst [vmem:[#allocation2 + $0x18] sm:$0xff] %v655
        %688 = vst [vmem:[#allocation2 + $0x20] sm:$0xff] %v656
        %689 = vst [vmem:[#allocation2 + $0x28] sm:$0xff] %v657
        %690 = vst [vmem:[#allocation2 + $0x30] sm:$0xff] %v658
        %691 = vst [vmem:[#allocation2 + $0x38] sm:$0xff] %v659
        %692 = vst [vmem:[#allocation2 + $0x40] sm:$0xff] %v660
        %693 = vst [vmem:[#allocation2 + $0x48] sm:$0xff] %v661
        %694 = vst [vmem:[#allocation2 + $0x50] sm:$0xff] %v662
        %695 = vst [vmem:[#allocation2 + $0x58] sm:$0xff] %v663
        %696 = vst [vmem:[#allocation2 + $0x60] sm:$0xff] %v664
        %697 = vst [vmem:[#allocation2 + $0x68] sm:$0xff] %v665
        %698 = vst [vmem:[#allocation2 + $0x70] sm:$0xff] %v666
        %699 = vst [vmem:[#allocation2 + $0x78] sm:$0xff] %v667
        %700 = vst [vmem:[#allocation2 + $0x80] sm:$0xff] %v668
        %701 = vst [vmem:[#allocation2 + $0x88] sm:$0xff] %v669
        %702 = vst [vmem:[#allocation2 + $0x90] sm:$0xff] %v670
        %703 = vst [vmem:[#allocation2 + $0x98] sm:$0xff] %v671
        %704 = vst [vmem:[#allocation2 + $0xa0] sm:$0xff] %v672
        %705 = vst [vmem:[#allocation2 + $0xa8] sm:$0xff] %v673
        %706 = vst [vmem:[#allocation2 + $0xb0] sm:$0xff] %v674
        %707 = vst [vmem:[#allocation2 + $0xb8] sm:$0xff] %v675
        %708 = vst [vmem:[#allocation2 + $0xc0] sm:$0xff] %v676
        %709 = vst [vmem:[#allocation2 + $0xc8] sm:$0xff] %v677
        %710 = vst [vmem:[#allocation2 + $0xd0] sm:$0xff] %v678
        %711 = vst [vmem:[#allocation2 + $0xd8] sm:$0xff] %v679
        %712 = vst [vmem:[#allocation2 + $0xe0] sm:$0xff] %v680
        %713 = vst [vmem:[#allocation2 + $0xe8] sm:$0xff] %v681
        %714 = vst [vmem:[#allocation2 + $0xf0] sm:$0xff] %v682
        %715 = vst [vmem:[#allocation2 + $0xf8] sm:$0xff] %v683
        // Predicated region
        $region45: #{tpu_custom_call.1} parent=31 // pred_check
          %p716 = pneg %p231
        $region46: #{tpu_custom_call.1} parent=31 // pred_check_branch
          %718 = sbr.rel (%p716) target = $region48
        $region47: #{tpu_custom_call.1} parent=31 // pred_region
          %v719 = vld [vmem:[#allocation2] sm:$0xff]
          %v720 = vld [vmem:[#allocation2 + $0x8] sm:$0xff]
          %v721 = vld [vmem:[#allocation2 + $0x10] sm:$0xff]
          %v722 = vld [vmem:[#allocation2 + $0x18] sm:$0xff]
          %v723 = vld [vmem:[#allocation2 + $0x20] sm:$0xff]
          %v724 = vld [vmem:[#allocation2 + $0x28] sm:$0xff]
          %v725 = vld [vmem:[#allocation2 + $0x30] sm:$0xff]
          %v726 = vld [vmem:[#allocation2 + $0x38] sm:$0xff]
          %v727 = vld [vmem:[#allocation2 + $0x40] sm:$0xff]
          %v728 = vld [vmem:[#allocation2 + $0x48] sm:$0xff]
          %v729 = vld [vmem:[#allocation2 + $0x50] sm:$0xff]
          %v730 = vld [vmem:[#allocation2 + $0x58] sm:$0xff]
          %v731 = vld [vmem:[#allocation2 + $0x60] sm:$0xff]
          %v732 = vld [vmem:[#allocation2 + $0x68] sm:$0xff]
          %v733 = vld [vmem:[#allocation2 + $0x70] sm:$0xff]
          %v734 = vld [vmem:[#allocation2 + $0x78] sm:$0xff]
          %v735 = vld [vmem:[#allocation2 + $0x80] sm:$0xff]
          %v736 = vld [vmem:[#allocation2 + $0x88] sm:$0xff]
          %v737 = vld [vmem:[#allocation2 + $0x90] sm:$0xff]
          %v738 = vld [vmem:[#allocation2 + $0x98] sm:$0xff]
          %v739 = vld [vmem:[#allocation2 + $0xa0] sm:$0xff]
          %v740 = vld [vmem:[#allocation2 + $0xa8] sm:$0xff]
          %v741 = vld [vmem:[#allocation2 + $0xb0] sm:$0xff]
          %v742 = vld [vmem:[#allocation2 + $0xb8] sm:$0xff]
          %v743 = vld [vmem:[#allocation2 + $0xc0] sm:$0xff]
          %v744 = vld [vmem:[#allocation2 + $0xc8] sm:$0xff]
          %v745 = vld [vmem:[#allocation2 + $0xd0] sm:$0xff]
          %v746 = vld [vmem:[#allocation2 + $0xd8] sm:$0xff]
          %v747 = vld [vmem:[#allocation2 + $0xe0] sm:$0xff]
          %v748 = vld [vmem:[#allocation2 + $0xe8] sm:$0xff]
          %v749 = vld [vmem:[#allocation2 + $0xf0] sm:$0xff]
          %v750 = vld [vmem:[#allocation2 + $0xf8] sm:$0xff]
          %v751 = vld [vmem:[%s2] sm:$0x1]
          %v753 = vlaneseq
          %v754 = vshrl.u32 %v753, 7
          %v755 = vsub.s32 0, %v754
          %v756 = vrot.slane %v751, %v755
          %v758 = vadd.f32 %v719, %v756
          %v759 = vadd.f32 %v720, %v756
          %v760 = vadd.f32 %v721, %v756
          %v761 = vadd.f32 %v722, %v756
          %v762 = vadd.f32 %v723, %v756
          %v763 = vadd.f32 %v724, %v756
          %v764 = vadd.f32 %v725, %v756
          %v765 = vadd.f32 %v726, %v756
          %v766 = vadd.f32 %v727, %v756
          %v767 = vadd.f32 %v728, %v756
          %v768 = vadd.f32 %v729, %v756
          %v769 = vadd.f32 %v730, %v756
          %v770 = vadd.f32 %v731, %v756
          %v771 = vadd.f32 %v732, %v756
          %v772 = vadd.f32 %v733, %v756
          %v773 = vadd.f32 %v734, %v756
          %v774 = vadd.f32 %v735, %v756
          %v775 = vadd.f32 %v736, %v756
          %v776 = vadd.f32 %v737, %v756
          %v777 = vadd.f32 %v738, %v756
          %v778 = vadd.f32 %v739, %v756
          %v779 = vadd.f32 %v740, %v756
          %v780 = vadd.f32 %v741, %v756
          %v781 = vadd.f32 %v742, %v756
          %v782 = vadd.f32 %v743, %v756
          %v783 = vadd.f32 %v744, %v756
          %v784 = vadd.f32 %v745, %v756
          %v785 = vadd.f32 %v746, %v756
          %v786 = vadd.f32 %v747, %v756
          %v787 = vadd.f32 %v748, %v756
          %v788 = vadd.f32 %v749, %v756
          %v789 = vadd.f32 %v750, %v756
          %v790 = vmax.f32 %v758, 0.0
          %v791 = vmax.f32 %v759, 0.0
          %v792 = vmax.f32 %v760, 0.0
          %v793 = vmax.f32 %v761, 0.0
          %v794 = vmax.f32 %v762, 0.0
          %v795 = vmax.f32 %v763, 0.0
          %v796 = vmax.f32 %v764, 0.0
          %v797 = vmax.f32 %v765, 0.0
          %v798 = vmax.f32 %v766, 0.0
          %v799 = vmax.f32 %v767, 0.0
          %v800 = vmax.f32 %v768, 0.0
          %v801 = vmax.f32 %v769, 0.0
          %v802 = vmax.f32 %v770, 0.0
          %v803 = vmax.f32 %v771, 0.0
          %v804 = vmax.f32 %v772, 0.0
          %v805 = vmax.f32 %v773, 0.0
          %v806 = vmax.f32 %v774, 0.0
          %v807 = vmax.f32 %v775, 0.0
          %v808 = vmax.f32 %v776, 0.0
          %v809 = vmax.f32 %v777, 0.0
          %v810 = vmax.f32 %v778, 0.0
          %v811 = vmax.f32 %v779, 0.0
          %v812 = vmax.f32 %v780, 0.0
          %v813 = vmax.f32 %v781, 0.0
          %v814 = vmax.f32 %v782, 0.0
          %v815 = vmax.f32 %v783, 0.0
          %v816 = vmax.f32 %v784, 0.0
          %v817 = vmax.f32 %v785, 0.0
          %v818 = vmax.f32 %v786, 0.0
          %v819 = vmax.f32 %v787, 0.0
          %v820 = vmax.f32 %v788, 0.0
          %v821 = vmax.f32 %v789, 0.0
          %v822 = vmin.f32 %v790, 6.0
          %v823 = vmin.f32 %v791, 6.0
          %v824 = vmin.f32 %v792, 6.0
          %v825 = vmin.f32 %v793, 6.0
          %v826 = vmin.f32 %v794, 6.0
          %v827 = vmin.f32 %v795, 6.0
          %v828 = vmin.f32 %v796, 6.0
          %v829 = vmin.f32 %v797, 6.0
          %v830 = vmin.f32 %v798, 6.0
          %v831 = vmin.f32 %v799, 6.0
          %v832 = vmin.f32 %v800, 6.0
          %v833 = vmin.f32 %v801, 6.0
          %v834 = vmin.f32 %v802, 6.0
          %v835 = vmin.f32 %v803, 6.0
          %v836 = vmin.f32 %v804, 6.0
          %v837 = vmin.f32 %v805, 6.0
          %v838 = vmin.f32 %v806, 6.0
          %v839 = vmin.f32 %v807, 6.0
          %v840 = vmin.f32 %v808, 6.0
          %v841 = vmin.f32 %v809, 6.0
          %v842 = vmin.f32 %v810, 6.0
          %v843 = vmin.f32 %v811, 6.0
          %v844 = vmin.f32 %v812, 6.0
          %v845 = vmin.f32 %v813, 6.0
          %v846 = vmin.f32 %v814, 6.0
          %v847 = vmin.f32 %v815, 6.0
          %v848 = vmin.f32 %v816, 6.0
          %v849 = vmin.f32 %v817, 6.0
          %v850 = vmin.f32 %v818, 6.0
          %v851 = vmin.f32 %v819, 6.0
          %v852 = vmin.f32 %v820, 6.0
          %v853 = vmin.f32 %v821, 6.0
          %v854 = vpack.c.bf16 %v823, %v822
          %v855 = vpack.c.bf16 %v825, %v824
          %v856 = vpack.c.bf16 %v827, %v826
          %v857 = vpack.c.bf16 %v829, %v828
          %v858 = vpack.c.bf16 %v831, %v830
          %v859 = vpack.c.bf16 %v833, %v832
          %v860 = vpack.c.bf16 %v835, %v834
          %v861 = vpack.c.bf16 %v837, %v836
          %v862 = vpack.c.bf16 %v839, %v838
          %v863 = vpack.c.bf16 %v841, %v840
          %v864 = vpack.c.bf16 %v843, %v842
          %v865 = vpack.c.bf16 %v845, %v844
          %v866 = vpack.c.bf16 %v847, %v846
          %v867 = vpack.c.bf16 %v849, %v848
          %v868 = vpack.c.bf16 %v851, %v850
          %v869 = vpack.c.bf16 %v853, %v852
          %v886 = vunpack.c.l.b16 %v854
          %v887 = vunpack.c.h.b16 %v854
          %v888 = vunpack.c.l.b16 %v855
          %v889 = vunpack.c.h.b16 %v855
          %v890 = vunpack.c.l.b16 %v856
          %v891 = vunpack.c.h.b16 %v856
          %v892 = vunpack.c.l.b16 %v857
          %v893 = vunpack.c.h.b16 %v857
          %v894 = vunpack.c.l.b16 %v858
          %v895 = vunpack.c.h.b16 %v858
          %v896 = vunpack.c.l.b16 %v859
          %v897 = vunpack.c.h.b16 %v859
          %v898 = vunpack.c.l.b16 %v860
          %v899 = vunpack.c.h.b16 %v860
          %v900 = vunpack.c.l.b16 %v861
          %v901 = vunpack.c.h.b16 %v861
          %v902 = vunpack.c.l.b16 %v862
          %v903 = vunpack.c.h.b16 %v862
          %v904 = vunpack.c.l.b16 %v863
          %v905 = vunpack.c.h.b16 %v863
          %v906 = vunpack.c.l.b16 %v864
          %v907 = vunpack.c.h.b16 %v864
          %v908 = vunpack.c.l.b16 %v865
          %v909 = vunpack.c.h.b16 %v865
          %v910 = vunpack.c.l.b16 %v866
          %v911 = vunpack.c.h.b16 %v866
          %v912 = vunpack.c.l.b16 %v867
          %v913 = vunpack.c.h.b16 %v867
          %v914 = vunpack.c.l.b16 %v868
          %v915 = vunpack.c.h.b16 %v868
          %v916 = vunpack.c.l.b16 %v869
          %v917 = vunpack.c.h.b16 %v869
          %v918 = vpack.c.b16 %v886, %v886
          %v919 = vpack.c.b16 %v887, %v887
          %v920 = vpack.c.b16 %v888, %v888
          %v921 = vpack.c.b16 %v889, %v889
          %v922 = vpack.c.b16 %v890, %v890
          %v923 = vpack.c.b16 %v891, %v891
          %v924 = vpack.c.b16 %v892, %v892
          %v925 = vpack.c.b16 %v893, %v893
          %v926 = vpack.c.b16 %v894, %v894
          %v927 = vpack.c.b16 %v895, %v895
          %v928 = vpack.c.b16 %v896, %v896
          %v929 = vpack.c.b16 %v897, %v897
          %v930 = vpack.c.b16 %v898, %v898
          %v931 = vpack.c.b16 %v899, %v899
          %v932 = vpack.c.b16 %v900, %v900
          %v933 = vpack.c.b16 %v901, %v901
          %v934 = vpack.c.b16 %v902, %v902
          %v935 = vpack.c.b16 %v903, %v903
          %v936 = vpack.c.b16 %v904, %v904
          %v937 = vpack.c.b16 %v905, %v905
          %v938 = vpack.c.b16 %v906, %v906
          %v939 = vpack.c.b16 %v907, %v907
          %v940 = vpack.c.b16 %v908, %v908
          %v941 = vpack.c.b16 %v909, %v909
          %v942 = vpack.c.b16 %v910, %v910
          %v943 = vpack.c.b16 %v911, %v911
          %v944 = vpack.c.b16 %v912, %v912
          %v945 = vpack.c.b16 %v913, %v913
          %v946 = vpack.c.b16 %v914, %v914
          %v947 = vpack.c.b16 %v915, %v915
          %v948 = vpack.c.b16 %v916, %v916
          %v949 = vpack.c.b16 %v917, %v917
          %982 = vst [vmem:[%s226] sm:$0xf] %v918
          %983 = vst [vmem:[%s226 + $0x4] sm:$0xf] %v919
          %984 = vst [vmem:[%s226 + $0x8] sm:$0xf] %v920
          %985 = vst [vmem:[%s226 + $0xc] sm:$0xf] %v921
          %986 = vst [vmem:[%s226 + $0x10] sm:$0xf] %v922
          %987 = vst [vmem:[%s226 + $0x14] sm:$0xf] %v923
          %988 = vst [vmem:[%s226 + $0x18] sm:$0xf] %v924
          %989 = vst [vmem:[%s226 + $0x1c] sm:$0xf] %v925
          %990 = vst [vmem:[%s226 + $0x20] sm:$0xf] %v926
          %991 = vst [vmem:[%s226 + $0x24] sm:$0xf] %v927
          %992 = vst [vmem:[%s226 + $0x28] sm:$0xf] %v928
          %993 = vst [vmem:[%s226 + $0x2c] sm:$0xf] %v929
          %994 = vst [vmem:[%s226 + $0x30] sm:$0xf] %v930
          %995 = vst [vmem:[%s226 + $0x34] sm:$0xf] %v931
          %996 = vst [vmem:[%s226 + $0x38] sm:$0xf] %v932
          %997 = vst [vmem:[%s226 + $0x3c] sm:$0xf] %v933
          %998 = vst [vmem:[%s226 + $0x40] sm:$0xf] %v934
          %999 = vst [vmem:[%s226 + $0x44] sm:$0xf] %v935
          %1000 = vst [vmem:[%s226 + $0x48] sm:$0xf] %v936
          %1001 = vst [vmem:[%s226 + $0x4c] sm:$0xf] %v937
          %1002 = vst [vmem:[%s226 + $0x50] sm:$0xf] %v938
          %1003 = vst [vmem:[%s226 + $0x54] sm:$0xf] %v939
          %1004 = vst [vmem:[%s226 + $0x58] sm:$0xf] %v940
          %1005 = vst [vmem:[%s226 + $0x5c] sm:$0xf] %v941
          %1006 = vst [vmem:[%s226 + $0x60] sm:$0xf] %v942
          %1007 = vst [vmem:[%s226 + $0x64] sm:$0xf] %v943
          %1008 = vst [vmem:[%s226 + $0x68] sm:$0xf] %v944
          %1009 = vst [vmem:[%s226 + $0x6c] sm:$0xf] %v945
          %1010 = vst [vmem:[%s226 + $0x70] sm:$0xf] %v946
          %1011 = vst [vmem:[%s226 + $0x74] sm:$0xf] %v947
          %1012 = vst [vmem:[%s226 + $0x78] sm:$0xf] %v948
          %1013 = vst [vmem:[%s226 + $0x7c] sm:$0xf] %v949
        $region48: #{tpu_custom_call.1} parent=31 // pred_fallthru
          _
        %s1014 = sand.u32 %s116, 1
        %s1015 = scalar_lea.sflag [#allocation5], %s1014
        %s1016 = sand.u32 %s116, 1
        %s1017 = smul.addr %s1016, 128
        %s1018 = scalar_lea.vmem [#allocation8], %s1017
        // Predicated region
        $region49: #{tpu_custom_call.1} parent=31 // pred_check
          %p1019 = pneg %p126
        $region50: #{tpu_custom_call.1} parent=31 // pred_check_branch
          %1021 = sbr.rel (%p1019) target = $region52
        $region51: #{tpu_custom_call.1} parent=31 // pred_region
          %s1022 = smul.u32 32, %s25
          %s1024 = ssub.s32 2048, 2048
          %1025 = vsyncadd %s1015, %s1024
          %s1026 = smul.addr %s1022, 64
          %s1027 = scalar_lea.hbm %s3, %s1026
          %s1028 = sshll.u32 %s1018, 4
          %s1029 = int_to_ptr.vmem [resolvable:$true] %s1028
          %1034 = dma.vmem_to_hbm [thread:$0]  %s1029, 2048, %s1027, %s1015, 64, 64, 4
        $region52: #{tpu_custom_call.1} parent=31 // pred_fallthru
          _
      $region32: #{tpu_custom_call.1} parent=5 // pred_fallthru
        _
      %p1035 = scmp.le.s32.totalorder 2, %s16
      // Predicated region
      $region53: #{tpu_custom_call.1} parent=5 // pred_check
        %p1036 = pneg %p1035
      $region54: #{tpu_custom_call.1} parent=5 // pred_check_branch
        %1038 = sbr.rel (%p1036) target = $region56
      $region55: #{tpu_custom_call.1} parent=5 // pred_region
        %s1039 = ssub.s32 %s16, 2
        // Predicated region
        $region57: #{tpu_custom_call.1} parent=55 // pred_check
          %p1040 = pneg %p132
        $region58: #{tpu_custom_call.1} parent=55 // pred_check_branch
          %1042 = sbr.rel (%p1040) target = $region60
        $region59: #{tpu_custom_call.1} parent=55 // pred_region
          %s1043 = sand.u32 %s117, 1
          %s1044 = scalar_lea.sflag [#allocation5], %s1043
          %s1045 = sand.u32 %s117, 1
          %s1046 = smul.addr %s1045, 128
          %s1047 = scalar_lea.vmem [#allocation8], %s1046
          %1048 = dma.done %s1044, 2048
        $region60: #{tpu_custom_call.1} parent=55 // pred_fallthru
          _
      $region56: #{tpu_custom_call.1} parent=5 // pred_fallthru
        _
    $region6: #{tpu_custom_call.1} parent=1 // loop_footer
      %s20 = sadd.s32 1, %s16
    $region7: #{tpu_custom_call.1} parent=1 // loop_footer_branch
      %15 = sbr.rel target = $region3
    $region8: #{tpu_custom_call.1} parent=1 // loop_exit
      _
    %1049 = vsyncpa [#allocation4], 1
    %s1050 = scalar_lea.sflag [#allocation4], 1
    %1051 = vsyncpa %s1050, 1
    %1052 = vsyncpa [#allocation7], 1
    %1053 = vsyncpa [#allocation5], 1
    %s1054 = scalar_lea.sflag [#allocation5], 1
    %1055 = vsyncpa %s1054, 1

</llo_original>
